<compile_context>
chip_gen: v7x
topology: tpu7x:2x2x1
jax: 0.10.0
libtpu: 0.0.40
codegen_flags: <defaults>
</compile_context>

<pallas_src>
import functools

import jax
import jax.numpy as jnp
from jax.experimental import pallas as pl
from jax.experimental.pallas import tpu as pltpu

# offsets into the packed parameter vector (row-major, output-major)
_W1, _B1 = 0, 48          # W1': (6, 8), b1': (6,)
_W2, _B2 = 54, 78         # W2': (4, 6), b2': (4,)
_W3, _B3 = 82, 86         # W3': (1, 4), b3': (1,)
_N_PARAMS = 87


def _mlp_kernel(p_ref, x_ref, o_ref):
    """p_ref: (87,) f32 SMEM (packed, sigmoid-folded params);
    x_ref: (8, T, 128) VMEM; o_ref: (T, 128) VMEM."""
    x = [x_ref[k] for k in range(8)]        # eight dense (T, 128) tiles

    # layer 1: 8 -> 6   (tanh form; /2 folded into W1'/b1')
    t1 = []
    for j in range(6):
        acc = p_ref[_B1 + j] + p_ref[_W1 + 8 * j] * x[0]
        for k in range(1, 8):
            acc = acc + p_ref[_W1 + 8 * j + k] * x[k]
        t1.append(jnp.tanh(acc))

    # layer 2: 6 -> 4   (previous layer's 0.5*t+0.5 affine folded into W2'/b2')
    t2 = []
    for j in range(4):
        acc = p_ref[_B2 + j] + p_ref[_W2 + 6 * j] * t1[0]
        for k in range(1, 6):
            acc = acc + p_ref[_W2 + 6 * j + k] * t1[k]
        t2.append(jnp.tanh(acc))

    # layer 3: 4 -> 1, final sigmoid as 0.5*tanh + 0.5, lane+sublane-dense store
    acc = p_ref[_B3] + p_ref[_W3] * t2[0]
    for k in range(1, 4):
        acc = acc + p_ref[_W3 + k] * t2[k]
    o_ref[...] = (0.5 * jnp.tanh(acc) + 0.5).astype(o_ref.dtype)


def _pack_params(params):
    """Pack params (JAX-style (in, out) layout) into one flat f32 vector,
    folding sigmoid(z) = 0.5*tanh(z/2) + 0.5 into the weights/biases:
      layer i computes t_i = tanh(W_i' * prev + b_i'),
      and the 0.5*t+0.5 of each hidden layer is absorbed by the next layer."""
    w1, b1 = params["w1"], params["b1"].reshape(-1)   # (8,6), (6,)
    w2, b2 = params["w2"], params["b2"].reshape(-1)   # (6,4), (4,)
    w3, b3 = params["w3"], params["b3"].reshape(-1)   # (4,1), (1,)

    w1p = 0.5 * w1.T                                   # (6,8)
    b1p = 0.5 * b1                                     # (6,)
    w2p = 0.25 * w2.T                                  # (4,6)
    b2p = 0.5 * b2 + 0.25 * jnp.sum(w2, axis=0)        # (4,)
    w3p = 0.25 * w3.T                                  # (1,4)
    b3p = 0.5 * b3 + 0.25 * jnp.sum(w3, axis=0)        # (1,)

    return jnp.concatenate([
        w1p.reshape(-1), b1p, w2p.reshape(-1), b2p, w3p.reshape(-1), b3p,
    ]).astype(jnp.float32)


@functools.partial(jax.jit, static_argnames=("block_rows",))
def muti_model_forward(x, params, *, block_rows=1024):
    """x: (N, 8) float. params: w1(8,6), b1(1,6), w2(6,4), b2(1,4), w3(4,1), b3(1,1).
    Returns (N, 1) float32, matching the PyTorch MutiModel forward.

    block_rows: sublane rows per grid step (each row = 128 samples); the default
    gives a 4 MiB f32 input tile -> ~9 MiB double-buffered + a few MiB of
    intermediates, comfortably inside v7x's 64 MiB VMEM while keeping >= 2
    parallel grid steps (both TensorCores busy) once N > 128 * block_rows."""
    assert block_rows % 8 == 0, "block_rows must be a multiple of 8 (sublanes)"
    n = x.shape[0]
    nb = pl.cdiv(n, 128)                     # number of 128-sample lane groups
    t = nb if nb <= block_rows else block_rows
    nb_pad = pl.cdiv(nb, t) * t              # pad up to a multiple of the tile
    n_pad = nb_pad * 128
    grid = (nb_pad // t,)

    # one fused pad+transpose pass (inside this jit): (N, 8) -> (8, nb_pad, 128)
    xt = jnp.zeros((8, n_pad), jnp.float32).at[:, :n].set(x.astype(jnp.float32).T)
    xt = xt.reshape(8, nb_pad, 128)
    p = _pack_params(params)

    y = pl.pallas_call(
        _mlp_kernel,
        out_shape=jax.ShapeDtypeStruct((nb_pad, 128), jnp.float32),
        grid_spec=pltpu.PrefetchScalarGridSpec(
            num_scalar_prefetch=0,
            grid=grid,
            in_specs=[
                # all 87 params resident in SMEM for the whole grid (no per-step DMA)
                pl.BlockSpec(memory_space=pltpu.MemorySpace.SMEM),
                # sublane+lane-dense batch tile: (8, t, 128) f32
                pl.BlockSpec((8, t, 128), lambda i: (0, i, 0)),
            ],
            out_specs=pl.BlockSpec((t, 128), lambda i: (i, 0)),
        ),
        compiler_params=pltpu.CompilerParams(
            # batch axis is embarrassingly parallel -> shards across TCs on v7x
            dimension_semantics=("parallel",),
            vmem_limit_bytes=48 * 1024 * 1024,
        ),
    )(p, xt)
    # padded tail lanes hold sigmoid(bias) garbage; sliced off here
    return y.reshape(n_pad)[:n].reshape(n, 1)


def init_params(key):
    """PyTorch-Linear-style uniform(-1/sqrt(fan_in), 1/sqrt(fan_in)) init."""
    ks = jax.random.split(key, 6)

    def lin(kw, kb, fan_in, fan_out):
        bound = 1.0 / jnp.sqrt(float(fan_in))
        w = jax.random.uniform(kw, (fan_in, fan_out), jnp.float32, -bound, bound)
        b = jax.random.uniform(kb, (1, fan_out), jnp.float32, -bound, bound)
        return w, b

    w1, b1 = lin(ks[0], ks[1], 8, 6)
    w2, b2 = lin(ks[2], ks[3], 6, 4)
    w3, b3 = lin(ks[4], ks[5], 4, 1)
    return {"w1": w1, "b1": b1, "w2": w2, "b2": b2, "w3": w3, "b3": b3}


def _reference(x, p):
    h = jax.nn.sigmoid(x @ p["w1"] + p["b1"])
    h = jax.nn.sigmoid(h @ p["w2"] + p["b2"])
    return jax.nn.sigmoid(h @ p["w3"] + p["b3"])


if __name__ == "__main__":
    key = jax.random.PRNGKey(0)
    kx, kx2, kp = jax.random.split(key, 3)
    params = init_params(kp)

    # small shape consistent with the module: batch=16, 8 input features
    x = jax.random.normal(kx, (16, 8), jnp.float32)
    out = jax.block_until_ready(muti_model_forward(x, params))
    ref = _reference(x, params)
    assert out.shape == (16, 1)
    assert jnp.allclose(out, ref, atol=1e-5, rtol=1e-5), float(jnp.max(jnp.abs(out - ref)))

    # second check: non-multiple-of-128 batch + multi-step grid (padding + tiling path)
    x2 = jax.random.normal(kx2, (2000, 8), jnp.float32)
    out2 = jax.block_until_ready(muti_model_forward(x2, params, block_rows=8))
    ref2 = _reference(x2, params)
    assert out2.shape == (2000, 1)
    assert jnp.allclose(out2, ref2, atol=1e-5, rtol=1e-5), float(jnp.max(jnp.abs(out2 - ref2)))

    print("KERNEL_OK")
</pallas_src>

<mosaic_0001>
module attributes {stable_mosaic.version = 11 : i64} {
  func.func @_mlp_kernel(%arg0: i32, %arg1: memref<87xf32, #tpu.memory_space<smem>>, %arg2: memref<8x1x128xf32, #tpu.memory_space<vmem>>, %arg3: memref<1x128xf32, #tpu.memory_space<vmem>>) attributes {dimension_semantics = [#tpu.dimension_semantics<parallel>], iteration_bounds = array<i64: 1>, scalar_prefetch = 0 : i64, scratch_operands = 0 : i64, tpu.core_type = #tpu.core_type<tc>, window_params = [{transform_indices = @transform_0, window_bounds = array<i64: 87>}, {transform_indices = @transform_1, window_bounds = array<i64: 8, 1, 128>}, {transform_indices = @transform_2, window_bounds = array<i64: 1, 128>}]} {
    %c0 = arith.constant 0 : index
    %c0_0 = arith.constant 0 : index
    %c0_1 = arith.constant 0 : index
    %0 = vector.load %arg2[%c0, %c0_0, %c0_1] : memref<8x1x128xf32, #tpu.memory_space<vmem>>, vector<1x1x128xf32>
    %1 = vector.shape_cast %0 : vector<1x1x128xf32> to vector<1x128xf32>
    %c1 = arith.constant 1 : index
    %c0_2 = arith.constant 0 : index
    %c0_3 = arith.constant 0 : index
    %2 = vector.load %arg2[%c1, %c0_2, %c0_3] : memref<8x1x128xf32, #tpu.memory_space<vmem>>, vector<1x1x128xf32>
    %3 = vector.shape_cast %2 : vector<1x1x128xf32> to vector<1x128xf32>
    %c2 = arith.constant 2 : index
    %c0_4 = arith.constant 0 : index
    %c0_5 = arith.constant 0 : index
    %4 = vector.load %arg2[%c2, %c0_4, %c0_5] : memref<8x1x128xf32, #tpu.memory_space<vmem>>, vector<1x1x128xf32>
    %5 = vector.shape_cast %4 : vector<1x1x128xf32> to vector<1x128xf32>
    %c3 = arith.constant 3 : index
    %c0_6 = arith.constant 0 : index
    %c0_7 = arith.constant 0 : index
    %6 = vector.load %arg2[%c3, %c0_6, %c0_7] : memref<8x1x128xf32, #tpu.memory_space<vmem>>, vector<1x1x128xf32>
    %7 = vector.shape_cast %6 : vector<1x1x128xf32> to vector<1x128xf32>
    %c4 = arith.constant 4 : index
    %c0_8 = arith.constant 0 : index
    %c0_9 = arith.constant 0 : index
    %8 = vector.load %arg2[%c4, %c0_8, %c0_9] : memref<8x1x128xf32, #tpu.memory_space<vmem>>, vector<1x1x128xf32>
    %9 = vector.shape_cast %8 : vector<1x1x128xf32> to vector<1x128xf32>
    %c5 = arith.constant 5 : index
    %c0_10 = arith.constant 0 : index
    %c0_11 = arith.constant 0 : index
    %10 = vector.load %arg2[%c5, %c0_10, %c0_11] : memref<8x1x128xf32, #tpu.memory_space<vmem>>, vector<1x1x128xf32>
    %11 = vector.shape_cast %10 : vector<1x1x128xf32> to vector<1x128xf32>
    %c6 = arith.constant 6 : index
    %c0_12 = arith.constant 0 : index
    %c0_13 = arith.constant 0 : index
    %12 = vector.load %arg2[%c6, %c0_12, %c0_13] : memref<8x1x128xf32, #tpu.memory_space<vmem>>, vector<1x1x128xf32>
    %13 = vector.shape_cast %12 : vector<1x1x128xf32> to vector<1x128xf32>
    %c7 = arith.constant 7 : index
    %c0_14 = arith.constant 0 : index
    %c0_15 = arith.constant 0 : index
    %14 = vector.load %arg2[%c7, %c0_14, %c0_15] : memref<8x1x128xf32, #tpu.memory_space<vmem>>, vector<1x1x128xf32>
    %15 = vector.shape_cast %14 : vector<1x1x128xf32> to vector<1x128xf32>
    %c48 = arith.constant 48 : index
    %16 = memref.load %arg1[%c48] : memref<87xf32, #tpu.memory_space<smem>>
    %c0_16 = arith.constant 0 : index
    %17 = memref.load %arg1[%c0_16] : memref<87xf32, #tpu.memory_space<smem>>
    %18 = vector.broadcast %17 : f32 to vector<1x128xf32>
    %19 = arith.mulf %18, %1 : vector<1x128xf32>
    %20 = vector.broadcast %16 : f32 to vector<1x128xf32>
    %21 = arith.addf %20, %19 : vector<1x128xf32>
    %c1_17 = arith.constant 1 : index
    %22 = memref.load %arg1[%c1_17] : memref<87xf32, #tpu.memory_space<smem>>
    %23 = vector.broadcast %22 : f32 to vector<1x128xf32>
    %24 = arith.mulf %23, %3 : vector<1x128xf32>
    %25 = arith.addf %21, %24 : vector<1x128xf32>
    %c2_18 = arith.constant 2 : index
    %26 = memref.load %arg1[%c2_18] : memref<87xf32, #tpu.memory_space<smem>>
    %27 = vector.broadcast %26 : f32 to vector<1x128xf32>
    %28 = arith.mulf %27, %5 : vector<1x128xf32>
    %29 = arith.addf %25, %28 : vector<1x128xf32>
    %c3_19 = arith.constant 3 : index
    %30 = memref.load %arg1[%c3_19] : memref<87xf32, #tpu.memory_space<smem>>
    %31 = vector.broadcast %30 : f32 to vector<1x128xf32>
    %32 = arith.mulf %31, %7 : vector<1x128xf32>
    %33 = arith.addf %29, %32 : vector<1x128xf32>
    %c4_20 = arith.constant 4 : index
    %34 = memref.load %arg1[%c4_20] : memref<87xf32, #tpu.memory_space<smem>>
    %35 = vector.broadcast %34 : f32 to vector<1x128xf32>
    %36 = arith.mulf %35, %9 : vector<1x128xf32>
    %37 = arith.addf %33, %36 : vector<1x128xf32>
    %c5_21 = arith.constant 5 : index
    %38 = memref.load %arg1[%c5_21] : memref<87xf32, #tpu.memory_space<smem>>
    %39 = vector.broadcast %38 : f32 to vector<1x128xf32>
    %40 = arith.mulf %39, %11 : vector<1x128xf32>
    %41 = arith.addf %37, %40 : vector<1x128xf32>
    %c6_22 = arith.constant 6 : index
    %42 = memref.load %arg1[%c6_22] : memref<87xf32, #tpu.memory_space<smem>>
    %43 = vector.broadcast %42 : f32 to vector<1x128xf32>
    %44 = arith.mulf %43, %13 : vector<1x128xf32>
    %45 = arith.addf %41, %44 : vector<1x128xf32>
    %c7_23 = arith.constant 7 : index
    %46 = memref.load %arg1[%c7_23] : memref<87xf32, #tpu.memory_space<smem>>
    %47 = vector.broadcast %46 : f32 to vector<1x128xf32>
    %48 = arith.mulf %47, %15 : vector<1x128xf32>
    %49 = arith.addf %45, %48 : vector<1x128xf32>
    %50 = math.tanh %49 : vector<1x128xf32>
    %c49 = arith.constant 49 : index
    %51 = memref.load %arg1[%c49] : memref<87xf32, #tpu.memory_space<smem>>
    %c8 = arith.constant 8 : index
    %52 = memref.load %arg1[%c8] : memref<87xf32, #tpu.memory_space<smem>>
    %53 = vector.broadcast %52 : f32 to vector<1x128xf32>
    %54 = arith.mulf %53, %1 : vector<1x128xf32>
    %55 = vector.broadcast %51 : f32 to vector<1x128xf32>
    %56 = arith.addf %55, %54 : vector<1x128xf32>
    %c9 = arith.constant 9 : index
    %57 = memref.load %arg1[%c9] : memref<87xf32, #tpu.memory_space<smem>>
    %58 = vector.broadcast %57 : f32 to vector<1x128xf32>
    %59 = arith.mulf %58, %3 : vector<1x128xf32>
    %60 = arith.addf %56, %59 : vector<1x128xf32>
    %c10 = arith.constant 10 : index
    %61 = memref.load %arg1[%c10] : memref<87xf32, #tpu.memory_space<smem>>
    %62 = vector.broadcast %61 : f32 to vector<1x128xf32>
    %63 = arith.mulf %62, %5 : vector<1x128xf32>
    %64 = arith.addf %60, %63 : vector<1x128xf32>
    %c11 = arith.constant 11 : index
    %65 = memref.load %arg1[%c11] : memref<87xf32, #tpu.memory_space<smem>>
    %66 = vector.broadcast %65 : f32 to vector<1x128xf32>
    %67 = arith.mulf %66, %7 : vector<1x128xf32>
    %68 = arith.addf %64, %67 : vector<1x128xf32>
    %c12 = arith.constant 12 : index
    %69 = memref.load %arg1[%c12] : memref<87xf32, #tpu.memory_space<smem>>
    %70 = vector.broadcast %69 : f32 to vector<1x128xf32>
    %71 = arith.mulf %70, %9 : vector<1x128xf32>
    %72 = arith.addf %68, %71 : vector<1x128xf32>
    %c13 = arith.constant 13 : index
    %73 = memref.load %arg1[%c13] : memref<87xf32, #tpu.memory_space<smem>>
    %74 = vector.broadcast %73 : f32 to vector<1x128xf32>
    %75 = arith.mulf %74, %11 : vector<1x128xf32>
    %76 = arith.addf %72, %75 : vector<1x128xf32>
    %c14 = arith.constant 14 : index
    %77 = memref.load %arg1[%c14] : memref<87xf32, #tpu.memory_space<smem>>
    %78 = vector.broadcast %77 : f32 to vector<1x128xf32>
    %79 = arith.mulf %78, %13 : vector<1x128xf32>
    %80 = arith.addf %76, %79 : vector<1x128xf32>
    %c15 = arith.constant 15 : index
    %81 = memref.load %arg1[%c15] : memref<87xf32, #tpu.memory_space<smem>>
    %82 = vector.broadcast %81 : f32 to vector<1x128xf32>
    %83 = arith.mulf %82, %15 : vector<1x128xf32>
    %84 = arith.addf %80, %83 : vector<1x128xf32>
    %85 = math.tanh %84 : vector<1x128xf32>
    %c50 = arith.constant 50 : index
    %86 = memref.load %arg1[%c50] : memref<87xf32, #tpu.memory_space<smem>>
    %c16 = arith.constant 16 : index
    %87 = memref.load %arg1[%c16] : memref<87xf32, #tpu.memory_space<smem>>
    %88 = vector.broadcast %87 : f32 to vector<1x128xf32>
    %89 = arith.mulf %88, %1 : vector<1x128xf32>
    %90 = vector.broadcast %86 : f32 to vector<1x128xf32>
    %91 = arith.addf %90, %89 : vector<1x128xf32>
    %c17 = arith.constant 17 : index
    %92 = memref.load %arg1[%c17] : memref<87xf32, #tpu.memory_space<smem>>
    %93 = vector.broadcast %92 : f32 to vector<1x128xf32>
    %94 = arith.mulf %93, %3 : vector<1x128xf32>
    %95 = arith.addf %91, %94 : vector<1x128xf32>
    %c18 = arith.constant 18 : index
    %96 = memref.load %arg1[%c18] : memref<87xf32, #tpu.memory_space<smem>>
    %97 = vector.broadcast %96 : f32 to vector<1x128xf32>
    %98 = arith.mulf %97, %5 : vector<1x128xf32>
    %99 = arith.addf %95, %98 : vector<1x128xf32>
    %c19 = arith.constant 19 : index
    %100 = memref.load %arg1[%c19] : memref<87xf32, #tpu.memory_space<smem>>
    %101 = vector.broadcast %100 : f32 to vector<1x128xf32>
    %102 = arith.mulf %101, %7 : vector<1x128xf32>
    %103 = arith.addf %99, %102 : vector<1x128xf32>
    %c20 = arith.constant 20 : index
    %104 = memref.load %arg1[%c20] : memref<87xf32, #tpu.memory_space<smem>>
    %105 = vector.broadcast %104 : f32 to vector<1x128xf32>
    %106 = arith.mulf %105, %9 : vector<1x128xf32>
    %107 = arith.addf %103, %106 : vector<1x128xf32>
    %c21 = arith.constant 21 : index
    %108 = memref.load %arg1[%c21] : memref<87xf32, #tpu.memory_space<smem>>
    %109 = vector.broadcast %108 : f32 to vector<1x128xf32>
    %110 = arith.mulf %109, %11 : vector<1x128xf32>
    %111 = arith.addf %107, %110 : vector<1x128xf32>
    %c22 = arith.constant 22 : index
    %112 = memref.load %arg1[%c22] : memref<87xf32, #tpu.memory_space<smem>>
    %113 = vector.broadcast %112 : f32 to vector<1x128xf32>
    %114 = arith.mulf %113, %13 : vector<1x128xf32>
    %115 = arith.addf %111, %114 : vector<1x128xf32>
    %c23 = arith.constant 23 : index
    %116 = memref.load %arg1[%c23] : memref<87xf32, #tpu.memory_space<smem>>
    %117 = vector.broadcast %116 : f32 to vector<1x128xf32>
    %118 = arith.mulf %117, %15 : vector<1x128xf32>
    %119 = arith.addf %115, %118 : vector<1x128xf32>
    %120 = math.tanh %119 : vector<1x128xf32>
    %c51 = arith.constant 51 : index
    %121 = memref.load %arg1[%c51] : memref<87xf32, #tpu.memory_space<smem>>
    %c24 = arith.constant 24 : index
    %122 = memref.load %arg1[%c24] : memref<87xf32, #tpu.memory_space<smem>>
    %123 = vector.broadcast %122 : f32 to vector<1x128xf32>
    %124 = arith.mulf %123, %1 : vector<1x128xf32>
    %125 = vector.broadcast %121 : f32 to vector<1x128xf32>
    %126 = arith.addf %125, %124 : vector<1x128xf32>
    %c25 = arith.constant 25 : index
    %127 = memref.load %arg1[%c25] : memref<87xf32, #tpu.memory_space<smem>>
    %128 = vector.broadcast %127 : f32 to vector<1x128xf32>
    %129 = arith.mulf %128, %3 : vector<1x128xf32>
    %130 = arith.addf %126, %129 : vector<1x128xf32>
    %c26 = arith.constant 26 : index
    %131 = memref.load %arg1[%c26] : memref<87xf32, #tpu.memory_space<smem>>
    %132 = vector.broadcast %131 : f32 to vector<1x128xf32>
    %133 = arith.mulf %132, %5 : vector<1x128xf32>
    %134 = arith.addf %130, %133 : vector<1x128xf32>
    %c27 = arith.constant 27 : index
    %135 = memref.load %arg1[%c27] : memref<87xf32, #tpu.memory_space<smem>>
    %136 = vector.broadcast %135 : f32 to vector<1x128xf32>
    %137 = arith.mulf %136, %7 : vector<1x128xf32>
    %138 = arith.addf %134, %137 : vector<1x128xf32>
    %c28 = arith.constant 28 : index
    %139 = memref.load %arg1[%c28] : memref<87xf32, #tpu.memory_space<smem>>
    %140 = vector.broadcast %139 : f32 to vector<1x128xf32>
    %141 = arith.mulf %140, %9 : vector<1x128xf32>
    %142 = arith.addf %138, %141 : vector<1x128xf32>
    %c29 = arith.constant 29 : index
    %143 = memref.load %arg1[%c29] : memref<87xf32, #tpu.memory_space<smem>>
    %144 = vector.broadcast %143 : f32 to vector<1x128xf32>
    %145 = arith.mulf %144, %11 : vector<1x128xf32>
    %146 = arith.addf %142, %145 : vector<1x128xf32>
    %c30 = arith.constant 30 : index
    %147 = memref.load %arg1[%c30] : memref<87xf32, #tpu.memory_space<smem>>
    %148 = vector.broadcast %147 : f32 to vector<1x128xf32>
    %149 = arith.mulf %148, %13 : vector<1x128xf32>
    %150 = arith.addf %146, %149 : vector<1x128xf32>
    %c31 = arith.constant 31 : index
    %151 = memref.load %arg1[%c31] : memref<87xf32, #tpu.memory_space<smem>>
    %152 = vector.broadcast %151 : f32 to vector<1x128xf32>
    %153 = arith.mulf %152, %15 : vector<1x128xf32>
    %154 = arith.addf %150, %153 : vector<1x128xf32>
    %155 = math.tanh %154 : vector<1x128xf32>
    %c52 = arith.constant 52 : index
    %156 = memref.load %arg1[%c52] : memref<87xf32, #tpu.memory_space<smem>>
    %c32 = arith.constant 32 : index
    %157 = memref.load %arg1[%c32] : memref<87xf32, #tpu.memory_space<smem>>
    %158 = vector.broadcast %157 : f32 to vector<1x128xf32>
    %159 = arith.mulf %158, %1 : vector<1x128xf32>
    %160 = vector.broadcast %156 : f32 to vector<1x128xf32>
    %161 = arith.addf %160, %159 : vector<1x128xf32>
    %c33 = arith.constant 33 : index
    %162 = memref.load %arg1[%c33] : memref<87xf32, #tpu.memory_space<smem>>
    %163 = vector.broadcast %162 : f32 to vector<1x128xf32>
    %164 = arith.mulf %163, %3 : vector<1x128xf32>
    %165 = arith.addf %161, %164 : vector<1x128xf32>
    %c34 = arith.constant 34 : index
    %166 = memref.load %arg1[%c34] : memref<87xf32, #tpu.memory_space<smem>>
    %167 = vector.broadcast %166 : f32 to vector<1x128xf32>
    %168 = arith.mulf %167, %5 : vector<1x128xf32>
    %169 = arith.addf %165, %168 : vector<1x128xf32>
    %c35 = arith.constant 35 : index
    %170 = memref.load %arg1[%c35] : memref<87xf32, #tpu.memory_space<smem>>
    %171 = vector.broadcast %170 : f32 to vector<1x128xf32>
    %172 = arith.mulf %171, %7 : vector<1x128xf32>
    %173 = arith.addf %169, %172 : vector<1x128xf32>
    %c36 = arith.constant 36 : index
    %174 = memref.load %arg1[%c36] : memref<87xf32, #tpu.memory_space<smem>>
    %175 = vector.broadcast %174 : f32 to vector<1x128xf32>
    %176 = arith.mulf %175, %9 : vector<1x128xf32>
    %177 = arith.addf %173, %176 : vector<1x128xf32>
    %c37 = arith.constant 37 : index
    %178 = memref.load %arg1[%c37] : memref<87xf32, #tpu.memory_space<smem>>
    %179 = vector.broadcast %178 : f32 to vector<1x128xf32>
    %180 = arith.mulf %179, %11 : vector<1x128xf32>
    %181 = arith.addf %177, %180 : vector<1x128xf32>
    %c38 = arith.constant 38 : index
    %182 = memref.load %arg1[%c38] : memref<87xf32, #tpu.memory_space<smem>>
    %183 = vector.broadcast %182 : f32 to vector<1x128xf32>
    %184 = arith.mulf %183, %13 : vector<1x128xf32>
    %185 = arith.addf %181, %184 : vector<1x128xf32>
    %c39 = arith.constant 39 : index
    %186 = memref.load %arg1[%c39] : memref<87xf32, #tpu.memory_space<smem>>
    %187 = vector.broadcast %186 : f32 to vector<1x128xf32>
    %188 = arith.mulf %187, %15 : vector<1x128xf32>
    %189 = arith.addf %185, %188 : vector<1x128xf32>
    %190 = math.tanh %189 : vector<1x128xf32>
    %c53 = arith.constant 53 : index
    %191 = memref.load %arg1[%c53] : memref<87xf32, #tpu.memory_space<smem>>
    %c40 = arith.constant 40 : index
    %192 = memref.load %arg1[%c40] : memref<87xf32, #tpu.memory_space<smem>>
    %193 = vector.broadcast %192 : f32 to vector<1x128xf32>
    %194 = arith.mulf %193, %1 : vector<1x128xf32>
    %195 = vector.broadcast %191 : f32 to vector<1x128xf32>
    %196 = arith.addf %195, %194 : vector<1x128xf32>
    %c41 = arith.constant 41 : index
    %197 = memref.load %arg1[%c41] : memref<87xf32, #tpu.memory_space<smem>>
    %198 = vector.broadcast %197 : f32 to vector<1x128xf32>
    %199 = arith.mulf %198, %3 : vector<1x128xf32>
    %200 = arith.addf %196, %199 : vector<1x128xf32>
    %c42 = arith.constant 42 : index
    %201 = memref.load %arg1[%c42] : memref<87xf32, #tpu.memory_space<smem>>
    %202 = vector.broadcast %201 : f32 to vector<1x128xf32>
    %203 = arith.mulf %202, %5 : vector<1x128xf32>
    %204 = arith.addf %200, %203 : vector<1x128xf32>
    %c43 = arith.constant 43 : index
    %205 = memref.load %arg1[%c43] : memref<87xf32, #tpu.memory_space<smem>>
    %206 = vector.broadcast %205 : f32 to vector<1x128xf32>
    %207 = arith.mulf %206, %7 : vector<1x128xf32>
    %208 = arith.addf %204, %207 : vector<1x128xf32>
    %c44 = arith.constant 44 : index
    %209 = memref.load %arg1[%c44] : memref<87xf32, #tpu.memory_space<smem>>
    %210 = vector.broadcast %209 : f32 to vector<1x128xf32>
    %211 = arith.mulf %210, %9 : vector<1x128xf32>
    %212 = arith.addf %208, %211 : vector<1x128xf32>
    %c45 = arith.constant 45 : index
    %213 = memref.load %arg1[%c45] : memref<87xf32, #tpu.memory_space<smem>>
    %214 = vector.broadcast %213 : f32 to vector<1x128xf32>
    %215 = arith.mulf %214, %11 : vector<1x128xf32>
    %216 = arith.addf %212, %215 : vector<1x128xf32>
    %c46 = arith.constant 46 : index
    %217 = memref.load %arg1[%c46] : memref<87xf32, #tpu.memory_space<smem>>
    %218 = vector.broadcast %217 : f32 to vector<1x128xf32>
    %219 = arith.mulf %218, %13 : vector<1x128xf32>
    %220 = arith.addf %216, %219 : vector<1x128xf32>
    %c47 = arith.constant 47 : index
    %221 = memref.load %arg1[%c47] : memref<87xf32, #tpu.memory_space<smem>>
    %222 = vector.broadcast %221 : f32 to vector<1x128xf32>
    %223 = arith.mulf %222, %15 : vector<1x128xf32>
    %224 = arith.addf %220, %223 : vector<1x128xf32>
    %225 = math.tanh %224 : vector<1x128xf32>
    %c78 = arith.constant 78 : index
    %226 = memref.load %arg1[%c78] : memref<87xf32, #tpu.memory_space<smem>>
    %c54 = arith.constant 54 : index
    %227 = memref.load %arg1[%c54] : memref<87xf32, #tpu.memory_space<smem>>
    %228 = vector.broadcast %227 : f32 to vector<1x128xf32>
    %229 = arith.mulf %228, %50 : vector<1x128xf32>
    %230 = vector.broadcast %226 : f32 to vector<1x128xf32>
    %231 = arith.addf %230, %229 : vector<1x128xf32>
    %c55 = arith.constant 55 : index
    %232 = memref.load %arg1[%c55] : memref<87xf32, #tpu.memory_space<smem>>
    %233 = vector.broadcast %232 : f32 to vector<1x128xf32>
    %234 = arith.mulf %233, %85 : vector<1x128xf32>
    %235 = arith.addf %231, %234 : vector<1x128xf32>
    %c56 = arith.constant 56 : index
    %236 = memref.load %arg1[%c56] : memref<87xf32, #tpu.memory_space<smem>>
    %237 = vector.broadcast %236 : f32 to vector<1x128xf32>
    %238 = arith.mulf %237, %120 : vector<1x128xf32>
    %239 = arith.addf %235, %238 : vector<1x128xf32>
    %c57 = arith.constant 57 : index
    %240 = memref.load %arg1[%c57] : memref<87xf32, #tpu.memory_space<smem>>
    %241 = vector.broadcast %240 : f32 to vector<1x128xf32>
    %242 = arith.mulf %241, %155 : vector<1x128xf32>
    %243 = arith.addf %239, %242 : vector<1x128xf32>
    %c58 = arith.constant 58 : index
    %244 = memref.load %arg1[%c58] : memref<87xf32, #tpu.memory_space<smem>>
    %245 = vector.broadcast %244 : f32 to vector<1x128xf32>
    %246 = arith.mulf %245, %190 : vector<1x128xf32>
    %247 = arith.addf %243, %246 : vector<1x128xf32>
    %c59 = arith.constant 59 : index
    %248 = memref.load %arg1[%c59] : memref<87xf32, #tpu.memory_space<smem>>
    %249 = vector.broadcast %248 : f32 to vector<1x128xf32>
    %250 = arith.mulf %249, %225 : vector<1x128xf32>
    %251 = arith.addf %247, %250 : vector<1x128xf32>
    %252 = math.tanh %251 : vector<1x128xf32>
    %c79 = arith.constant 79 : index
    %253 = memref.load %arg1[%c79] : memref<87xf32, #tpu.memory_space<smem>>
    %c60 = arith.constant 60 : index
    %254 = memref.load %arg1[%c60] : memref<87xf32, #tpu.memory_space<smem>>
    %255 = vector.broadcast %254 : f32 to vector<1x128xf32>
    %256 = arith.mulf %255, %50 : vector<1x128xf32>
    %257 = vector.broadcast %253 : f32 to vector<1x128xf32>
    %258 = arith.addf %257, %256 : vector<1x128xf32>
    %c61 = arith.constant 61 : index
    %259 = memref.load %arg1[%c61] : memref<87xf32, #tpu.memory_space<smem>>
    %260 = vector.broadcast %259 : f32 to vector<1x128xf32>
    %261 = arith.mulf %260, %85 : vector<1x128xf32>
    %262 = arith.addf %258, %261 : vector<1x128xf32>
    %c62 = arith.constant 62 : index
    %263 = memref.load %arg1[%c62] : memref<87xf32, #tpu.memory_space<smem>>
    %264 = vector.broadcast %263 : f32 to vector<1x128xf32>
    %265 = arith.mulf %264, %120 : vector<1x128xf32>
    %266 = arith.addf %262, %265 : vector<1x128xf32>
    %c63 = arith.constant 63 : index
    %267 = memref.load %arg1[%c63] : memref<87xf32, #tpu.memory_space<smem>>
    %268 = vector.broadcast %267 : f32 to vector<1x128xf32>
    %269 = arith.mulf %268, %155 : vector<1x128xf32>
    %270 = arith.addf %266, %269 : vector<1x128xf32>
    %c64 = arith.constant 64 : index
    %271 = memref.load %arg1[%c64] : memref<87xf32, #tpu.memory_space<smem>>
    %272 = vector.broadcast %271 : f32 to vector<1x128xf32>
    %273 = arith.mulf %272, %190 : vector<1x128xf32>
    %274 = arith.addf %270, %273 : vector<1x128xf32>
    %c65 = arith.constant 65 : index
    %275 = memref.load %arg1[%c65] : memref<87xf32, #tpu.memory_space<smem>>
    %276 = vector.broadcast %275 : f32 to vector<1x128xf32>
    %277 = arith.mulf %276, %225 : vector<1x128xf32>
    %278 = arith.addf %274, %277 : vector<1x128xf32>
    %279 = math.tanh %278 : vector<1x128xf32>
    %c80 = arith.constant 80 : index
    %280 = memref.load %arg1[%c80] : memref<87xf32, #tpu.memory_space<smem>>
    %c66 = arith.constant 66 : index
    %281 = memref.load %arg1[%c66] : memref<87xf32, #tpu.memory_space<smem>>
    %282 = vector.broadcast %281 : f32 to vector<1x128xf32>
    %283 = arith.mulf %282, %50 : vector<1x128xf32>
    %284 = vector.broadcast %280 : f32 to vector<1x128xf32>
    %285 = arith.addf %284, %283 : vector<1x128xf32>
    %c67 = arith.constant 67 : index
    %286 = memref.load %arg1[%c67] : memref<87xf32, #tpu.memory_space<smem>>
    %287 = vector.broadcast %286 : f32 to vector<1x128xf32>
    %288 = arith.mulf %287, %85 : vector<1x128xf32>
    %289 = arith.addf %285, %288 : vector<1x128xf32>
    %c68 = arith.constant 68 : index
    %290 = memref.load %arg1[%c68] : memref<87xf32, #tpu.memory_space<smem>>
    %291 = vector.broadcast %290 : f32 to vector<1x128xf32>
    %292 = arith.mulf %291, %120 : vector<1x128xf32>
    %293 = arith.addf %289, %292 : vector<1x128xf32>
    %c69 = arith.constant 69 : index
    %294 = memref.load %arg1[%c69] : memref<87xf32, #tpu.memory_space<smem>>
    %295 = vector.broadcast %294 : f32 to vector<1x128xf32>
    %296 = arith.mulf %295, %155 : vector<1x128xf32>
    %297 = arith.addf %293, %296 : vector<1x128xf32>
    %c70 = arith.constant 70 : index
    %298 = memref.load %arg1[%c70] : memref<87xf32, #tpu.memory_space<smem>>
    %299 = vector.broadcast %298 : f32 to vector<1x128xf32>
    %300 = arith.mulf %299, %190 : vector<1x128xf32>
    %301 = arith.addf %297, %300 : vector<1x128xf32>
    %c71 = arith.constant 71 : index
    %302 = memref.load %arg1[%c71] : memref<87xf32, #tpu.memory_space<smem>>
    %303 = vector.broadcast %302 : f32 to vector<1x128xf32>
    %304 = arith.mulf %303, %225 : vector<1x128xf32>
    %305 = arith.addf %301, %304 : vector<1x128xf32>
    %306 = math.tanh %305 : vector<1x128xf32>
    %c81 = arith.constant 81 : index
    %307 = memref.load %arg1[%c81] : memref<87xf32, #tpu.memory_space<smem>>
    %c72 = arith.constant 72 : index
    %308 = memref.load %arg1[%c72] : memref<87xf32, #tpu.memory_space<smem>>
    %309 = vector.broadcast %308 : f32 to vector<1x128xf32>
    %310 = arith.mulf %309, %50 : vector<1x128xf32>
    %311 = vector.broadcast %307 : f32 to vector<1x128xf32>
    %312 = arith.addf %311, %310 : vector<1x128xf32>
    %c73 = arith.constant 73 : index
    %313 = memref.load %arg1[%c73] : memref<87xf32, #tpu.memory_space<smem>>
    %314 = vector.broadcast %313 : f32 to vector<1x128xf32>
    %315 = arith.mulf %314, %85 : vector<1x128xf32>
    %316 = arith.addf %312, %315 : vector<1x128xf32>
    %c74 = arith.constant 74 : index
    %317 = memref.load %arg1[%c74] : memref<87xf32, #tpu.memory_space<smem>>
    %318 = vector.broadcast %317 : f32 to vector<1x128xf32>
    %319 = arith.mulf %318, %120 : vector<1x128xf32>
    %320 = arith.addf %316, %319 : vector<1x128xf32>
    %c75 = arith.constant 75 : index
    %321 = memref.load %arg1[%c75] : memref<87xf32, #tpu.memory_space<smem>>
    %322 = vector.broadcast %321 : f32 to vector<1x128xf32>
    %323 = arith.mulf %322, %155 : vector<1x128xf32>
    %324 = arith.addf %320, %323 : vector<1x128xf32>
    %c76 = arith.constant 76 : index
    %325 = memref.load %arg1[%c76] : memref<87xf32, #tpu.memory_space<smem>>
    %326 = vector.broadcast %325 : f32 to vector<1x128xf32>
    %327 = arith.mulf %326, %190 : vector<1x128xf32>
    %328 = arith.addf %324, %327 : vector<1x128xf32>
    %c77 = arith.constant 77 : index
    %329 = memref.load %arg1[%c77] : memref<87xf32, #tpu.memory_space<smem>>
    %330 = vector.broadcast %329 : f32 to vector<1x128xf32>
    %331 = arith.mulf %330, %225 : vector<1x128xf32>
    %332 = arith.addf %328, %331 : vector<1x128xf32>
    %333 = math.tanh %332 : vector<1x128xf32>
    %c86 = arith.constant 86 : index
    %334 = memref.load %arg1[%c86] : memref<87xf32, #tpu.memory_space<smem>>
    %c82 = arith.constant 82 : index
    %335 = memref.load %arg1[%c82] : memref<87xf32, #tpu.memory_space<smem>>
    %336 = vector.broadcast %335 : f32 to vector<1x128xf32>
    %337 = arith.mulf %336, %252 : vector<1x128xf32>
    %338 = vector.broadcast %334 : f32 to vector<1x128xf32>
    %339 = arith.addf %338, %337 : vector<1x128xf32>
    %c83 = arith.constant 83 : index
    %340 = memref.load %arg1[%c83] : memref<87xf32, #tpu.memory_space<smem>>
    %341 = vector.broadcast %340 : f32 to vector<1x128xf32>
    %342 = arith.mulf %341, %279 : vector<1x128xf32>
    %343 = arith.addf %339, %342 : vector<1x128xf32>
    %c84 = arith.constant 84 : index
    %344 = memref.load %arg1[%c84] : memref<87xf32, #tpu.memory_space<smem>>
    %345 = vector.broadcast %344 : f32 to vector<1x128xf32>
    %346 = arith.mulf %345, %306 : vector<1x128xf32>
    %347 = arith.addf %343, %346 : vector<1x128xf32>
    %c85 = arith.constant 85 : index
    %348 = memref.load %arg1[%c85] : memref<87xf32, #tpu.memory_space<smem>>
    %349 = vector.broadcast %348 : f32 to vector<1x128xf32>
    %350 = arith.mulf %349, %333 : vector<1x128xf32>
    %351 = arith.addf %347, %350 : vector<1x128xf32>
    %352 = math.tanh %351 : vector<1x128xf32>
    %cst = arith.constant 5.000000e-01 : f32
    %353 = vector.broadcast %cst : f32 to vector<1x128xf32>
    %354 = arith.mulf %353, %352 : vector<1x128xf32>
    %cst_24 = arith.constant 5.000000e-01 : f32
    %355 = vector.broadcast %cst_24 : f32 to vector<1x128xf32>
    %356 = arith.addf %354, %355 : vector<1x128xf32>
    %c0_25 = arith.constant 0 : index
    %c0_26 = arith.constant 0 : index
    %357 = vector.load %arg3[%c0_25, %c0_26] : memref<1x128xf32, #tpu.memory_space<vmem>>, vector<1x128xf32>
    tpu.vector_store %arg3[%c0_25, %c0_26], %356 {strides = array<i32>} : memref<1x128xf32, #tpu.memory_space<vmem>>, vector<1x128xf32>,
    return
  }
  func.func @transform_0(%arg0: i32) -> i32 {
    %c0_i32 = arith.constant 0 : i32
    %c0_i32_0 = arith.constant 0 : i32
    return %c0_i32 : i32
  }
  func.func @transform_1(%arg0: i32) -> (i32, i32, i32) {
    %c0_i32 = arith.constant 0 : i32
    %c0_i32_0 = arith.constant 0 : i32
    %c0_i32_1 = arith.constant 0 : i32
    return %c0_i32, %arg0, %c0_i32_0 : i32, i32, i32
  }
  func.func @transform_2(%arg0: i32) -> (i32, i32) {
    %c0_i32 = arith.constant 0 : i32
    %c0_i32_0 = arith.constant 0 : i32
    return %arg0, %c0_i32 : i32, i32
  }
}

</mosaic_0001>

<llo_original>
// kernel: muti_model_forward.1
$region0: #{muti_model_forward.1}
  #allocation0 [shape = 'u32[]', space=smem, size = 0x4, offset = 0x4, fixed_abs, tag = 'smem constant byte address 0x4 - core index']
  #allocation1 [shape = 'u32[144,128]{1,0:T(1,128)}', space=vmem, size = 0x12000, scoped, tag = 'internal scratch']
  %s0 = inlined_call_operand.vmem [shape: f32[87], index: 0, kind: input, shape index: {}]
  %s1 = inlined_call_operand.vmem [shape: f32[8,1,128], index: 1, kind: input, shape index: {}]
  %s2 = inlined_call_operand.vmem [shape: f32[1,128], index: 2, kind: output, shape index: {}]
  %s3 = sld [smem:[#allocation0]]
  $region22: #{muti_model_forward.1} parent=0
    _
  %s5 = ssub.s32 1, %s3
  %s6 = scalar_select 0, %s5, %s3
  $region1: #{muti_model_forward.1} parent=0
    #allocation2 [shape = 'u8[512]{0}', space=smem, size = 0x200, scoped, tag = 'input window, operand 0, single buffered']
    #allocation3 [shape = 's32[1]{0}', space=sflag, size = 0x4, scoped, tag = 'scoped memory for muti_model_forward.1']
    %7 = vsyncpa [#allocation3], 0
    // Predicated region
    $region2: #{muti_model_forward.1} parent=1 // pred_check
      _
    $region3: #{muti_model_forward.1} parent=1 // pred_check_branch
      %9 = sbr.rel (0) target = $region5
    $region4: #{muti_model_forward.1} parent=1 // pred_region
      %s11 = ssub.s32 16, 16
      %12 = vsyncadd [#allocation3], %s11
      %s14 = sshll.u32 %s0, 4
      %s15 = int_to_ptr.vmem [resolvable:$true] %s14
      %17 = dma.vmem_to_smem %s15, 16, [#allocation2], [#allocation3]
    $region5: #{muti_model_forward.1} parent=1 // pred_fallthru
      _
    // Predicated region
    $region6: #{muti_model_forward.1} parent=1 // pred_check
      _
    $region7: #{muti_model_forward.1} parent=1 // pred_check_branch
      %19 = sbr.rel (0) target = $region9
    $region8: #{muti_model_forward.1} parent=1 // pred_region
      _
    $region9: #{muti_model_forward.1} parent=1 // pred_fallthru
      _
    // Predicated region
    $region10: #{muti_model_forward.1} parent=1 // pred_check
      _
    $region11: #{muti_model_forward.1} parent=1 // pred_check_branch
      %21 = sbr.rel (0) target = $region13
    $region12: #{muti_model_forward.1} parent=1 // pred_region
      %22 = dma.done [#allocation3], 16
    $region13: #{muti_model_forward.1} parent=1 // pred_fallthru
      _
    %23 = sfence
    %v24 = vld [vmem:[%s1] sm:$0x1]
    %s25 = scalar_lea.vmem %s1, 1
    %v26 = vld [vmem:[%s25] sm:$0x1]
    %s27 = scalar_lea.vmem %s1, 2
    %v28 = vld [vmem:[%s27] sm:$0x1]
    %s29 = scalar_lea.vmem %s1, 3
    %v30 = vld [vmem:[%s29] sm:$0x1]
    %s31 = scalar_lea.vmem %s1, 4
    %v32 = vld [vmem:[%s31] sm:$0x1]
    %s33 = scalar_lea.vmem %s1, 5
    %v34 = vld [vmem:[%s33] sm:$0x1]
    %s35 = scalar_lea.vmem %s1, 6
    %v36 = vld [vmem:[%s35] sm:$0x1]
    %s37 = scalar_lea.vmem %s1, 7
    %v38 = vld [vmem:[%s37] sm:$0x1]
    %s39 = sld [smem:[#allocation2 + $0x30]]
    %s40 = sld [smem:[#allocation2]]
    %v41 = vstv %s40
    %v42 = vmul.f32 %v41, %v24
    %v43 = vstv %s39
    %v44 = vadd.f32 %v43, %v42
    %s45 = sld [smem:[#allocation2 + $0x1]]
    %v46 = vstv %s45
    %v47 = vmul.f32 %v46, %v26
    %v48 = vadd.f32 %v44, %v47
    %s49 = sld [smem:[#allocation2 + $0x2]]
    %v50 = vstv %s49
    %v51 = vmul.f32 %v50, %v28
    %v52 = vadd.f32 %v48, %v51
    %s53 = sld [smem:[#allocation2 + $0x3]]
    %v54 = vstv %s53
    %v55 = vmul.f32 %v54, %v30
    %v56 = vadd.f32 %v52, %v55
    %s57 = sld [smem:[#allocation2 + $0x4]]
    %v58 = vstv %s57
    %v59 = vmul.f32 %v58, %v32
    %v60 = vadd.f32 %v56, %v59
    %s61 = sld [smem:[#allocation2 + $0x5]]
    %v62 = vstv %s61
    %v63 = vmul.f32 %v62, %v34
    %v64 = vadd.f32 %v60, %v63
    %s65 = sld [smem:[#allocation2 + $0x6]]
    %v66 = vstv %s65
    %v67 = vmul.f32 %v66, %v36
    %v68 = vadd.f32 %v64, %v67
    %s69 = sld [smem:[#allocation2 + $0x7]]
    %v70 = vstv %s69
    %v71 = vmul.f32 %v70, %v38
    %v72 = vadd.f32 %v68, %v71
    %v73 = vtanh.pop %v72
    %s74 = sld [smem:[#allocation2 + $0x31]]
    %s75 = sld [smem:[#allocation2 + $0x8]]
    %v76 = vstv %s75
    %v77 = vmul.f32 %v76, %v24
    %v78 = vstv %s74
    %v79 = vadd.f32 %v78, %v77
    %s80 = sld [smem:[#allocation2 + $0x9]]
    %v81 = vstv %s80
    %v82 = vmul.f32 %v81, %v26
    %v83 = vadd.f32 %v79, %v82
    %s84 = sld [smem:[#allocation2 + $0xa]]
    %v85 = vstv %s84
    %v86 = vmul.f32 %v85, %v28
    %v87 = vadd.f32 %v83, %v86
    %s88 = sld [smem:[#allocation2 + $0xb]]
    %v89 = vstv %s88
    %v90 = vmul.f32 %v89, %v30
    %v91 = vadd.f32 %v87, %v90
    %s92 = sld [smem:[#allocation2 + $0xc]]
    %v93 = vstv %s92
    %v94 = vmul.f32 %v93, %v32
    %v95 = vadd.f32 %v91, %v94
    %s96 = sld [smem:[#allocation2 + $0xd]]
    %v97 = vstv %s96
    %v98 = vmul.f32 %v97, %v34
    %v99 = vadd.f32 %v95, %v98
    %s100 = sld [smem:[#allocation2 + $0xe]]
    %v101 = vstv %s100
    %v102 = vmul.f32 %v101, %v36
    %v103 = vadd.f32 %v99, %v102
    %s104 = sld [smem:[#allocation2 + $0xf]]
    %v105 = vstv %s104
    %v106 = vmul.f32 %v105, %v38
    %v107 = vadd.f32 %v103, %v106
    %v108 = vtanh.pop %v107
    %s109 = sld [smem:[#allocation2 + $0x32]]
    %s110 = sld [smem:[#allocation2 + $0x10]]
    %v111 = vstv %s110
    %v112 = vmul.f32 %v111, %v24
    %v113 = vstv %s109
    %v114 = vadd.f32 %v113, %v112
    %s115 = sld [smem:[#allocation2 + $0x11]]
    %v116 = vstv %s115
    %v117 = vmul.f32 %v116, %v26
    %v118 = vadd.f32 %v114, %v117
    %s119 = sld [smem:[#allocation2 + $0x12]]
    %v120 = vstv %s119
    %v121 = vmul.f32 %v120, %v28
    %v122 = vadd.f32 %v118, %v121
    %s123 = sld [smem:[#allocation2 + $0x13]]
    %v124 = vstv %s123
    %v125 = vmul.f32 %v124, %v30
    %v126 = vadd.f32 %v122, %v125
    %s127 = sld [smem:[#allocation2 + $0x14]]
    %v128 = vstv %s127
    %v129 = vmul.f32 %v128, %v32
    %v130 = vadd.f32 %v126, %v129
    %s131 = sld [smem:[#allocation2 + $0x15]]
    %v132 = vstv %s131
    %v133 = vmul.f32 %v132, %v34
    %v134 = vadd.f32 %v130, %v133
    %s135 = sld [smem:[#allocation2 + $0x16]]
    %v136 = vstv %s135
    %v137 = vmul.f32 %v136, %v36
    %v138 = vadd.f32 %v134, %v137
    %s139 = sld [smem:[#allocation2 + $0x17]]
    %v140 = vstv %s139
    %v141 = vmul.f32 %v140, %v38
    %v142 = vadd.f32 %v138, %v141
    %v143 = vtanh.pop %v142
    %s144 = sld [smem:[#allocation2 + $0x33]]
    %s145 = sld [smem:[#allocation2 + $0x18]]
    %v146 = vstv %s145
    %v147 = vmul.f32 %v146, %v24
    %v148 = vstv %s144
    %v149 = vadd.f32 %v148, %v147
    %s150 = sld [smem:[#allocation2 + $0x19]]
    %v151 = vstv %s150
    %v152 = vmul.f32 %v151, %v26
    %v153 = vadd.f32 %v149, %v152
    %s154 = sld [smem:[#allocation2 + $0x1a]]
    %v155 = vstv %s154
    %v156 = vmul.f32 %v155, %v28
    %v157 = vadd.f32 %v153, %v156
    %s158 = sld [smem:[#allocation2 + $0x1b]]
    %v159 = vstv %s158
    %v160 = vmul.f32 %v159, %v30
    %v161 = vadd.f32 %v157, %v160
    %s162 = sld [smem:[#allocation2 + $0x1c]]
    %v163 = vstv %s162
    %v164 = vmul.f32 %v163, %v32
    %v165 = vadd.f32 %v161, %v164
    %s166 = sld [smem:[#allocation2 + $0x1d]]
    %v167 = vstv %s166
    %v168 = vmul.f32 %v167, %v34
    %v169 = vadd.f32 %v165, %v168
    %s170 = sld [smem:[#allocation2 + $0x1e]]
    %v171 = vstv %s170
    %v172 = vmul.f32 %v171, %v36
    %v173 = vadd.f32 %v169, %v172
    %s174 = sld [smem:[#allocation2 + $0x1f]]
    %v175 = vstv %s174
    %v176 = vmul.f32 %v175, %v38
    %v177 = vadd.f32 %v173, %v176
    %v178 = vtanh.pop %v177
    %s179 = sld [smem:[#allocation2 + $0x34]]
    %s180 = sld [smem:[#allocation2 + $0x20]]
    %v181 = vstv %s180
    %v182 = vmul.f32 %v181, %v24
    %v183 = vstv %s179
    %v184 = vadd.f32 %v183, %v182
    %s185 = sld [smem:[#allocation2 + $0x21]]
    %v186 = vstv %s185
    %v187 = vmul.f32 %v186, %v26
    %v188 = vadd.f32 %v184, %v187
    %s189 = sld [smem:[#allocation2 + $0x22]]
    %v190 = vstv %s189
    %v191 = vmul.f32 %v190, %v28
    %v192 = vadd.f32 %v188, %v191
    %s193 = sld [smem:[#allocation2 + $0x23]]
    %v194 = vstv %s193
    %v195 = vmul.f32 %v194, %v30
    %v196 = vadd.f32 %v192, %v195
    %s197 = sld [smem:[#allocation2 + $0x24]]
    %v198 = vstv %s197
    %v199 = vmul.f32 %v198, %v32
    %v200 = vadd.f32 %v196, %v199
    %s201 = sld [smem:[#allocation2 + $0x25]]
    %v202 = vstv %s201
    %v203 = vmul.f32 %v202, %v34
    %v204 = vadd.f32 %v200, %v203
    %s205 = sld [smem:[#allocation2 + $0x26]]
    %v206 = vstv %s205
    %v207 = vmul.f32 %v206, %v36
    %v208 = vadd.f32 %v204, %v207
    %s209 = sld [smem:[#allocation2 + $0x27]]
    %v210 = vstv %s209
    %v211 = vmul.f32 %v210, %v38
    %v212 = vadd.f32 %v208, %v211
    %v213 = vtanh.pop %v212
    %s214 = sld [smem:[#allocation2 + $0x35]]
    %s215 = sld [smem:[#allocation2 + $0x28]]
    %v216 = vstv %s215
    %v217 = vmul.f32 %v216, %v24
    %v218 = vstv %s214
    %v219 = vadd.f32 %v218, %v217
    %s220 = sld [smem:[#allocation2 + $0x29]]
    %v221 = vstv %s220
    %v222 = vmul.f32 %v221, %v26
    %v223 = vadd.f32 %v219, %v222
    %s224 = sld [smem:[#allocation2 + $0x2a]]
    %v225 = vstv %s224
    %v226 = vmul.f32 %v225, %v28
    %v227 = vadd.f32 %v223, %v226
    %s228 = sld [smem:[#allocation2 + $0x2b]]
    %v229 = vstv %s228
    %v230 = vmul.f32 %v229, %v30
    %v231 = vadd.f32 %v227, %v230
    %s232 = sld [smem:[#allocation2 + $0x2c]]
    %v233 = vstv %s232
    %v234 = vmul.f32 %v233, %v32
    %v235 = vadd.f32 %v231, %v234
    %s236 = sld [smem:[#allocation2 + $0x2d]]
    %v237 = vstv %s236
    %v238 = vmul.f32 %v237, %v34
    %v239 = vadd.f32 %v235, %v238
    %s240 = sld [smem:[#allocation2 + $0x2e]]
    %v241 = vstv %s240
    %v242 = vmul.f32 %v241, %v36
    %v243 = vadd.f32 %v239, %v242
    %s244 = sld [smem:[#allocation2 + $0x2f]]
    %v245 = vstv %s244
    %v246 = vmul.f32 %v245, %v38
    %v247 = vadd.f32 %v243, %v246
    %v248 = vtanh.pop %v247
    %s249 = sld [smem:[#allocation2 + $0x4e]]
    %s250 = sld [smem:[#allocation2 + $0x36]]
    %v251 = vstv %s250
    %v252 = vmul.f32 %v251, %v73
    %v253 = vstv %s249
    %v254 = vadd.f32 %v253, %v252
    %s255 = sld [smem:[#allocation2 + $0x37]]
    %v256 = vstv %s255
    %v257 = vmul.f32 %v256, %v108
    %v258 = vadd.f32 %v254, %v257
    %s259 = sld [smem:[#allocation2 + $0x38]]
    %v260 = vstv %s259
    %v261 = vmul.f32 %v260, %v143
    %v262 = vadd.f32 %v258, %v261
    %s263 = sld [smem:[#allocation2 + $0x39]]
    %v264 = vstv %s263
    %v265 = vmul.f32 %v264, %v178
    %v266 = vadd.f32 %v262, %v265
    %s267 = sld [smem:[#allocation2 + $0x3a]]
    %v268 = vstv %s267
    %v269 = vmul.f32 %v268, %v213
    %v270 = vadd.f32 %v266, %v269
    %s271 = sld [smem:[#allocation2 + $0x3b]]
    %v272 = vstv %s271
    %v273 = vmul.f32 %v272, %v248
    %v274 = vadd.f32 %v270, %v273
    %v275 = vtanh.pop %v274
    %s276 = sld [smem:[#allocation2 + $0x4f]]
    %s277 = sld [smem:[#allocation2 + $0x3c]]
    %v278 = vstv %s277
    %v279 = vmul.f32 %v278, %v73
    %v280 = vstv %s276
    %v281 = vadd.f32 %v280, %v279
    %s282 = sld [smem:[#allocation2 + $0x3d]]
    %v283 = vstv %s282
    %v284 = vmul.f32 %v283, %v108
    %v285 = vadd.f32 %v281, %v284
    %s286 = sld [smem:[#allocation2 + $0x3e]]
    %v287 = vstv %s286
    %v288 = vmul.f32 %v287, %v143
    %v289 = vadd.f32 %v285, %v288
    %s290 = sld [smem:[#allocation2 + $0x3f]]
    %v291 = vstv %s290
    %v292 = vmul.f32 %v291, %v178
    %v293 = vadd.f32 %v289, %v292
    %s294 = sld [smem:[#allocation2 + $0x40]]
    %v295 = vstv %s294
    %v296 = vmul.f32 %v295, %v213
    %v297 = vadd.f32 %v293, %v296
    %s298 = sld [smem:[#allocation2 + $0x41]]
    %v299 = vstv %s298
    %v300 = vmul.f32 %v299, %v248
    %v301 = vadd.f32 %v297, %v300
    %v302 = vtanh.pop %v301
    %s303 = sld [smem:[#allocation2 + $0x50]]
    %s304 = sld [smem:[#allocation2 + $0x42]]
    %v305 = vstv %s304
    %v306 = vmul.f32 %v305, %v73
    %v307 = vstv %s303
    %v308 = vadd.f32 %v307, %v306
    %s309 = sld [smem:[#allocation2 + $0x43]]
    %v310 = vstv %s309
    %v311 = vmul.f32 %v310, %v108
    %v312 = vadd.f32 %v308, %v311
    %s313 = sld [smem:[#allocation2 + $0x44]]
    %v314 = vstv %s313
    %v315 = vmul.f32 %v314, %v143
    %v316 = vadd.f32 %v312, %v315
    %s317 = sld [smem:[#allocation2 + $0x45]]
    %v318 = vstv %s317
    %v319 = vmul.f32 %v318, %v178
    %v320 = vadd.f32 %v316, %v319
    %s321 = sld [smem:[#allocation2 + $0x46]]
    %v322 = vstv %s321
    %v323 = vmul.f32 %v322, %v213
    %v324 = vadd.f32 %v320, %v323
    %s325 = sld [smem:[#allocation2 + $0x47]]
    %v326 = vstv %s325
    %v327 = vmul.f32 %v326, %v248
    %v328 = vadd.f32 %v324, %v327
    %v329 = vtanh.pop %v328
    %s330 = sld [smem:[#allocation2 + $0x51]]
    %s331 = sld [smem:[#allocation2 + $0x48]]
    %v332 = vstv %s331
    %v333 = vmul.f32 %v332, %v73
    %v334 = vstv %s330
    %v335 = vadd.f32 %v334, %v333
    %s336 = sld [smem:[#allocation2 + $0x49]]
    %v337 = vstv %s336
    %v338 = vmul.f32 %v337, %v108
    %v339 = vadd.f32 %v335, %v338
    %s340 = sld [smem:[#allocation2 + $0x4a]]
    %v341 = vstv %s340
    %v342 = vmul.f32 %v341, %v143
    %v343 = vadd.f32 %v339, %v342
    %s344 = sld [smem:[#allocation2 + $0x4b]]
    %v345 = vstv %s344
    %v346 = vmul.f32 %v345, %v178
    %v347 = vadd.f32 %v343, %v346
    %s348 = sld [smem:[#allocation2 + $0x4c]]
    %v349 = vstv %s348
    %v350 = vmul.f32 %v349, %v213
    %v351 = vadd.f32 %v347, %v350
    %s352 = sld [smem:[#allocation2 + $0x4d]]
    %v353 = vstv %s352
    %v354 = vmul.f32 %v353, %v248
    %v355 = vadd.f32 %v351, %v354
    %v356 = vtanh.pop %v355
    %s357 = sld [smem:[#allocation2 + $0x56]]
    %s358 = sld [smem:[#allocation2 + $0x52]]
    %v359 = vstv %s358
    %v360 = vmul.f32 %v359, %v275
    %v361 = vstv %s357
    %v362 = vadd.f32 %v361, %v360
    %s363 = sld [smem:[#allocation2 + $0x53]]
    %v364 = vstv %s363
    %v365 = vmul.f32 %v364, %v302
    %v366 = vadd.f32 %v362, %v365
    %s367 = sld [smem:[#allocation2 + $0x54]]
    %v368 = vstv %s367
    %v369 = vmul.f32 %v368, %v329
    %v370 = vadd.f32 %v366, %v369
    %s371 = sld [smem:[#allocation2 + $0x55]]
    %v372 = vstv %s371
    %v373 = vmul.f32 %v372, %v356
    %v374 = vadd.f32 %v370, %v373
    %v375 = vtanh.pop %v374
    %v376 = vmul.f32 %v375, 0.5
    %v377 = vadd.f32 %v376, 0.5
    %378 = vst [vmem:[%s2] sm:$0x1] %v377
    // Predicated region
    $region14: #{muti_model_forward.1} parent=1 // pred_check
      _
    $region15: #{muti_model_forward.1} parent=1 // pred_check_branch
      %380 = sbr.rel (0) target = $region17
    $region16: #{muti_model_forward.1} parent=1 // pred_region
      _
    $region17: #{muti_model_forward.1} parent=1 // pred_fallthru
      _
    // Predicated region
    $region18: #{muti_model_forward.1} parent=1 // pred_check
      _
    $region19: #{muti_model_forward.1} parent=1 // pred_check_branch
      %382 = sbr.rel (0) target = $region21
    $region20: #{muti_model_forward.1} parent=1 // pred_region
      _
    $region21: #{muti_model_forward.1} parent=1 // pred_fallthru
      _
    %383 = vsyncpa [#allocation3], 1

</llo_original>
